<compile_context>
chip_gen: v5e
topology: v5e:2x2
jax: 0.10.0
libtpu: 0.0.40
codegen_flags: <defaults>
</compile_context>

<pallas_src>
import jax
import jax.numpy as jnp
from jax import lax
from jax.experimental import pallas as pl
from jax.experimental.pallas import tpu as pltpu


def _round_up(x, m):
    return ((x + m - 1) // m) * m


def _make_mlp_kernel(num_layers, num_in, chunk):
    """Fused transposed MLP kernel.

    refs = (xT_ref, wT_0, b_0, ..., wT_{L-1}, b_{L-1}, oT_ref)
      xT_ref : (num_in, bt)        activations, batch on the 128-lane axis
      wT_i   : (n_out_i, n_in_i)   transposed weights (kernel computes h <- wT @ h)
      b_i    : (n_out_i, 1)        bias column (per-sublane add, broadcast over lanes)
      oT_ref : (num_out, bt)
    """

    def kernel(*refs):
        x_ref = refs[0]
        o_ref = refs[-1]
        params = refs[1:-1]

        # Tiny parameters: load once per grid step, stay resident in vregs across the chunk loop.
        w0 = params[0][...].astype(jnp.float32)                       # (n_out0, num_in)
        b0 = params[1][...].astype(jnp.float32)                       # (n_out0, 1)
        ws = [params[2 * i][...].astype(jnp.float32) for i in range(1, num_layers)]
        bs = [params[2 * i + 1][...].astype(jnp.float32) for i in range(1, num_layers)]

        n_chunks = x_ref.shape[1] // chunk                             # static

        def body(c, carry):
            off = pl.multiple_of(c * chunk, chunk)
            x = x_ref[:, pl.ds(off, chunk)].astype(jnp.float32)        # (num_in, chunk)

            # ---- Layer 0: K = num_in is tiny -> broadcast FMAs on the VPU, skip the MXU. ----
            h = b0 + w0[:, 0:1] * x[0:1, :]                            # (n_out0, chunk)
            for k in range(1, num_in):
                h = h + w0[:, k:k + 1] * x[k:k + 1, :]
            if num_layers > 1:
                h = jnp.maximum(h, 0.0)

            # ---- Remaining layers on the MXU: h <- wT @ h + b (N dim = chunk lanes). ----
            for i in range(num_layers - 1):
                h = jnp.dot(ws[i], h, preferred_element_type=jnp.float32) + bs[i]
                if i < num_layers - 2:
                    h = jnp.maximum(h, 0.0)

            o_ref[:, pl.ds(off, chunk)] = h.astype(o_ref.dtype)        # lane-dense store
            return carry

        lax.fori_loop(0, n_chunks, body, 0)

    return kernel


def orbital_block_forward(x, weights, biases, *, batch_tile_max=65536):
    """OrbitalBlock forward pass as a single fused Pallas kernel.

    x:       (B, num_in) float32
    weights: list of (n_in_i, n_out_i) float32   (y = x @ W + b convention == torch x @ W.T + b)
    biases:  list of (1, n_out_i) float32
    returns: (B, num_out) float32
    """
    B, num_in = x.shape
    num_layers = len(weights)
    num_out = weights[-1].shape[1]

    # ---- Batch tiling: huge lane-dense tiles; >= 2 tiles whenever possible (v7x megacore). ----
    B128 = _round_up(B, 128)
    bt_max = max(128, _round_up(batch_tile_max, 128))
    if B128 < 256:
        bt = B128
    else:
        bt = min(bt_max, _round_up(pl.cdiv(B128, 2), 128))
    bt = max(128, bt)
    # Inner lane-chunk that divides bt (keeps h in <= 16 vregs -> no spilling of the hidden state).
    chunk = 512 if bt % 512 == 0 else (256 if bt % 256 == 0 else 128)
    B_pad = _round_up(B, bt)
    grid = (B_pad // bt,)

    # ---- Layout prep (outside the kernel, fused by XLA): transpose so batch is the lane axis;
    #      pad only when actually needed.
    xT = x.T
    if B_pad != B:
        xT = jnp.pad(xT, ((0, 0), (0, B_pad - B)))
    wTs = [jnp.asarray(w, jnp.float32).T for w in weights]                 # (n_out, n_in)
    bcols = [jnp.asarray(b, jnp.float32).reshape(-1, 1) for b in biases]   # (n_out, 1)

    in_specs = [pl.BlockSpec((num_in, bt), lambda i: (0, i))]
    flat_params = []
    for wT, bc in zip(wTs, bcols):
        in_specs.append(pl.BlockSpec(wT.shape, lambda i: (0, 0)))
        in_specs.append(pl.BlockSpec(bc.shape, lambda i: (0, 0)))
        flat_params.extend([wT, bc])

    out_spec = pl.BlockSpec((num_out, bt), lambda i: (0, i))

    kernel = _make_mlp_kernel(num_layers, num_in, chunk)

    # Mem-bound advisory cost estimate (dtype-correct itemsizes).
    param_bytes = sum(int(p.size) * p.dtype.itemsize for p in flat_params)
    io_bytes = int(xT.size) * xT.dtype.itemsize + int(B_pad) * num_out * jnp.dtype(x.dtype).itemsize
    cost = pl.CostEstimate(
        flops=2 * B_pad * sum(int(w.shape[0]) * int(w.shape[1]) for w in weights),
        transcendentals=0,
        bytes_accessed=io_bytes + param_bytes,
    )

    # Per-step VMEM: double-buffered input (8, bt) f32 + output (8, bt) f32 blocks + params/headroom.
    vmem_need = 2 * (8 * bt * 4) * 2 + (2 << 20)
    vmem_limit = int(min(48 * 1024 * 1024, max(vmem_need, 16 * 1024 * 1024)))

    outT = pl.pallas_call(
        kernel,
        out_shape=jax.ShapeDtypeStruct((num_out, B_pad), x.dtype),
        grid_spec=pltpu.PrefetchScalarGridSpec(
            num_scalar_prefetch=0,
            grid=grid,
            in_specs=in_specs,
            out_specs=out_spec,
        ),
        compiler_params=pltpu.CompilerParams(
            dimension_semantics=("parallel",),   # shards batch tiles across v7x's 2 TensorCores
            vmem_limit_bytes=vmem_limit,
        ),
        cost_estimate=cost,
    )(xT, *flat_params)

    out = outT if B_pad == B else outT[:, :B]
    # TODO(synk): the (num_out, B) -> (B, num_out) transpose stays in XLA; if the consumer can
    # accept feature-major output this copy disappears entirely.
    return out.T


def init_orbital_block_params(key, num_in=2, n_hid=(32, 32), num_out=4):
    """Deterministic init mimicking torch.nn.Linear default (U(-1/sqrt(fan_in), 1/sqrt(fan_in)))."""
    layer_dims = [num_in] + list(n_hid) + [num_out]
    weights, biases = [], []
    for n_in, n_out in zip(layer_dims[:-1], layer_dims[1:]):
        key, kw, kb = jax.random.split(key, 3)
        bound = 1.0 / (n_in ** 0.5)
        w = jax.random.uniform(kw, (n_in, n_out), jnp.float32, -bound, bound)
        b = jax.random.uniform(kb, (1, n_out), jnp.float32, -bound, bound)
        weights.append(w)
        biases.append(b)
    return weights, biases


def orbital_block_reference(x, weights, biases):
    h = x
    for i, (w, b) in enumerate(zip(weights, biases)):
        h = h @ w + b
        if i < len(weights) - 1:
            h = jnp.maximum(h, 0.0)
    return h


if __name__ == "__main__":
    key = jax.random.PRNGKey(0)
    key, kx = jax.random.split(key)

    num_in = 2
    n_hid = (32, 32)   # hidden layers of the MLP; num_out is fixed to 4 by the module
    batch = 16         # small, ragged batch (not a multiple of the tile) -> exercises padding

    x = jax.random.normal(kx, (batch, num_in), jnp.float32)
    weights, biases = init_orbital_block_params(key, num_in=num_in, n_hid=n_hid, num_out=4)

    out = jax.block_until_ready(orbital_block_forward(x, weights, biases))
    ref = orbital_block_reference(x, weights, biases)
    assert out.shape == (batch, 4)
    assert jnp.allclose(out, ref, atol=1e-5, rtol=1e-5), "Pallas kernel mismatch vs reference"

    # Multi-tile + ragged path: 2 batch tiles, in-kernel chunk loop, padded columns sliced off.
    key, kx2 = jax.random.split(key)
    x2 = jax.random.normal(kx2, (300, num_in), jnp.float32)
    out2 = jax.block_until_ready(orbital_block_forward(x2, weights, biases))
    ref2 = orbital_block_reference(x2, weights, biases)
    assert out2.shape == (300, 4)
    assert jnp.allclose(out2, ref2, atol=1e-5, rtol=1e-5), "Pallas kernel mismatch vs reference (tiled)"

    print("KERNEL_OK")
</pallas_src>

<mosaic_0001>
module attributes {stable_mosaic.version = 11 : i64} {
  func.func @kernel(%arg0: i32, %arg1: memref<2x128xf32, #tpu.memory_space<vmem>>, %arg2: memref<32x2xf32, #tpu.memory_space<vmem>>, %arg3: memref<32x1xf32, #tpu.memory_space<vmem>>, %arg4: memref<32x32xf32, #tpu.memory_space<vmem>>, %arg5: memref<32x1xf32, #tpu.memory_space<vmem>>, %arg6: memref<4x32xf32, #tpu.memory_space<vmem>>, %arg7: memref<4x1xf32, #tpu.memory_space<vmem>>, %arg8: memref<4x128xf32, #tpu.memory_space<vmem>>) attributes {dimension_semantics = [#tpu.dimension_semantics<parallel>], iteration_bounds = array<i64: 1>, scalar_prefetch = 0 : i64, scratch_operands = 0 : i64, tpu.core_type = #tpu.core_type<tc>, window_params = [{transform_indices = @transform_0, window_bounds = array<i64: 2, 128>}, {pipeline_mode = #tpu.pipeline_mode<synchronous>, transform_indices = @transform_1, window_bounds = array<i64: 32, 2>}, {pipeline_mode = #tpu.pipeline_mode<synchronous>, transform_indices = @transform_2, window_bounds = array<i64: 32, 1>}, {pipeline_mode = #tpu.pipeline_mode<synchronous>, transform_indices = @transform_3, window_bounds = array<i64: 32, 32>}, {pipeline_mode = #tpu.pipeline_mode<synchronous>, transform_indices = @transform_4, window_bounds = array<i64: 32, 1>}, {pipeline_mode = #tpu.pipeline_mode<synchronous>, transform_indices = @transform_5, window_bounds = array<i64: 4, 32>}, {pipeline_mode = #tpu.pipeline_mode<synchronous>, transform_indices = @transform_6, window_bounds = array<i64: 4, 1>}, {transform_indices = @transform_7, window_bounds = array<i64: 4, 128>}]} {
    %c0 = arith.constant 0 : index
    %c0_0 = arith.constant 0 : index
    %0 = vector.load %arg2[%c0, %c0_0] : memref<32x2xf32, #tpu.memory_space<vmem>>, vector<32x2xf32>
    %c0_1 = arith.constant 0 : index
    %c0_2 = arith.constant 0 : index
    %1 = vector.load %arg3[%c0_1, %c0_2] : memref<32x1xf32, #tpu.memory_space<vmem>>, vector<32x1xf32>
    %c0_3 = arith.constant 0 : index
    %c0_4 = arith.constant 0 : index
    %2 = vector.load %arg4[%c0_3, %c0_4] : memref<32x32xf32, #tpu.memory_space<vmem>>, vector<32x32xf32>
    %c0_5 = arith.constant 0 : index
    %c0_6 = arith.constant 0 : index
    %3 = vector.load %arg6[%c0_5, %c0_6] : memref<4x32xf32, #tpu.memory_space<vmem>>, vector<4x32xf32>
    %c0_7 = arith.constant 0 : index
    %c0_8 = arith.constant 0 : index
    %4 = vector.load %arg5[%c0_7, %c0_8] : memref<32x1xf32, #tpu.memory_space<vmem>>, vector<32x1xf32>
    %c0_9 = arith.constant 0 : index
    %c0_10 = arith.constant 0 : index
    %5 = vector.load %arg7[%c0_9, %c0_10] : memref<4x1xf32, #tpu.memory_space<vmem>>, vector<4x1xf32>
    %c0_i32 = arith.constant 0 : i32
    %c128_i32 = arith.constant 128 : i32
    %6 = arith.muli %c0_i32, %c128_i32 : i32
    %7 = tpu.assume_multiple %6, 128 : i32
    %c0_11 = arith.constant 0 : index
    %8 = arith.index_cast %7 : i32 to index
    %9 = vector.load %arg1[%c0_11, %8] : memref<2x128xf32, #tpu.memory_space<vmem>>, vector<2x128xf32>
    %10 = vector.extract_strided_slice %0 {offsets = [0, 0], sizes = [32, 1], strides = [1, 1]} : vector<32x2xf32> to vector<32x1xf32>
    %11 = vector.extract_strided_slice %9 {offsets = [0, 0], sizes = [1, 128], strides = [1, 1]} : vector<2x128xf32> to vector<1x128xf32>
    %12 = vector.broadcast %10 : vector<32x1xf32> to vector<32x128xf32>
    %13 = vector.broadcast %11 : vector<1x128xf32> to vector<32x128xf32>
    %14 = arith.mulf %12, %13 : vector<32x128xf32>
    %15 = vector.broadcast %1 : vector<32x1xf32> to vector<32x128xf32>
    %16 = arith.addf %15, %14 : vector<32x128xf32>
    %17 = vector.extract_strided_slice %0 {offsets = [0, 1], sizes = [32, 1], strides = [1, 1]} : vector<32x2xf32> to vector<32x1xf32>
    %18 = vector.extract_strided_slice %9 {offsets = [1, 0], sizes = [1, 128], strides = [1, 1]} : vector<2x128xf32> to vector<1x128xf32>
    %19 = vector.broadcast %17 : vector<32x1xf32> to vector<32x128xf32>
    %20 = vector.broadcast %18 : vector<1x128xf32> to vector<32x128xf32>
    %21 = arith.mulf %19, %20 : vector<32x128xf32>
    %22 = arith.addf %16, %21 : vector<32x128xf32>
    %cst = arith.constant 0.000000e+00 : f32
    %23 = vector.broadcast %cst : f32 to vector<32x128xf32>
    %24 = arith.maximumf %22, %23 : vector<32x128xf32>
    %cst_12 = arith.constant dense<0.000000e+00> : vector<32x128xf32>
    %25 = tpu.matmul %2, %24, %cst_12 {dimension_numbers = #tpu.dot_dimension_numbers<[1], [0], [0], [1], [0, 0, 1, 1], [], []>} : vector<32x32xf32>, vector<32x128xf32>, vector<32x128xf32> -> vector<32x128xf32>
    %26 = vector.broadcast %4 : vector<32x1xf32> to vector<32x128xf32>
    %27 = arith.addf %25, %26 : vector<32x128xf32>
    %cst_13 = arith.constant 0.000000e+00 : f32
    %28 = vector.broadcast %cst_13 : f32 to vector<32x128xf32>
    %29 = arith.maximumf %27, %28 : vector<32x128xf32>
    %cst_14 = arith.constant dense<0.000000e+00> : vector<4x128xf32>
    %30 = tpu.matmul %3, %29, %cst_14 {dimension_numbers = #tpu.dot_dimension_numbers<[1], [0], [0], [1], [0, 0, 1, 1], [], []>} : vector<4x32xf32>, vector<32x128xf32>, vector<4x128xf32> -> vector<4x128xf32>
    %31 = vector.broadcast %5 : vector<4x1xf32> to vector<4x128xf32>
    %32 = arith.addf %30, %31 : vector<4x128xf32>
    %c0_15 = arith.constant 0 : index
    %33 = arith.index_cast %7 : i32 to index
    %34 = vector.load %arg8[%c0_15, %33] : memref<4x128xf32, #tpu.memory_space<vmem>>, vector<4x128xf32>
    tpu.vector_store %arg8[%c0_15, %33], %32 {strides = array<i32>} : memref<4x128xf32, #tpu.memory_space<vmem>>, vector<4x128xf32>,
    %c1_i32 = arith.constant 1 : i32
    return
  }
  func.func @transform_0(%arg0: i32) -> (i32, i32) {
    %c0_i32 = arith.constant 0 : i32
    %c0_i32_0 = arith.constant 0 : i32
    return %c0_i32, %arg0 : i32, i32
  }
  func.func @transform_1(%arg0: i32) -> (i32, i32) {
    %c0_i32 = arith.constant 0 : i32
    %c0_i32_0 = arith.constant 0 : i32
    %c0_i32_1 = arith.constant 0 : i32
    return %c0_i32, %c0_i32_0 : i32, i32
  }
  func.func @transform_2(%arg0: i32) -> (i32, i32) {
    %c0_i32 = arith.constant 0 : i32
    %c0_i32_0 = arith.constant 0 : i32
    %c0_i32_1 = arith.constant 0 : i32
    return %c0_i32, %c0_i32_0 : i32, i32
  }
  func.func @transform_3(%arg0: i32) -> (i32, i32) {
    %c0_i32 = arith.constant 0 : i32
    %c0_i32_0 = arith.constant 0 : i32
    %c0_i32_1 = arith.constant 0 : i32
    return %c0_i32, %c0_i32_0 : i32, i32
  }
  func.func @transform_4(%arg0: i32) -> (i32, i32) {
    %c0_i32 = arith.constant 0 : i32
    %c0_i32_0 = arith.constant 0 : i32
    %c0_i32_1 = arith.constant 0 : i32
    return %c0_i32, %c0_i32_0 : i32, i32
  }
  func.func @transform_5(%arg0: i32) -> (i32, i32) {
    %c0_i32 = arith.constant 0 : i32
    %c0_i32_0 = arith.constant 0 : i32
    %c0_i32_1 = arith.constant 0 : i32
    return %c0_i32, %c0_i32_0 : i32, i32
  }
  func.func @transform_6(%arg0: i32) -> (i32, i32) {
    %c0_i32 = arith.constant 0 : i32
    %c0_i32_0 = arith.constant 0 : i32
    %c0_i32_1 = arith.constant 0 : i32
    return %c0_i32, %c0_i32_0 : i32, i32
  }
  func.func @transform_7(%arg0: i32) -> (i32, i32) {
    %c0_i32 = arith.constant 0 : i32
    %c0_i32_0 = arith.constant 0 : i32
    return %c0_i32, %arg0 : i32, i32
  }
}

</mosaic_0001>

<llo_original>
// kernel: tpu_custom_call.1
$region0: #{tpu_custom_call.1}
  #allocation0 [shape = 'u32[]', space=smem, size = 0x4, offset = 0x4, fixed_abs, tag = 'smem constant byte address 0x4 - core index']
  #allocation1 [shape = 'u32[72,128]{1,0:T(1,128)}', space=vmem, size = 0x9000, scoped, tag = 'internal scratch']
  %s0 = inlined_call_operand.vmem [shape: f32[2,128], index: 0, kind: input, shape index: {}]
  %s1 = inlined_call_operand.vmem [shape: f32[32,2], index: 1, kind: input, shape index: {}]
  %s2 = inlined_call_operand.vmem [shape: f32[32,1], index: 2, kind: input, shape index: {}]
  %s3 = inlined_call_operand.vmem [shape: f32[32,32], index: 3, kind: input, shape index: {}]
  %s4 = inlined_call_operand.vmem [shape: f32[32,1], index: 4, kind: input, shape index: {}]
  %s5 = inlined_call_operand.vmem [shape: f32[4,32], index: 5, kind: input, shape index: {}]
  %s6 = inlined_call_operand.vmem [shape: f32[4,1], index: 6, kind: input, shape index: {}]
  %s7 = inlined_call_operand.hbm [shape: f32[4,128], index: 7, kind: output, shape index: {}]
  %s8 = sld [smem:[#allocation0]]
  $region38: #{tpu_custom_call.1} parent=0
    _
  %s10 = ssub.s32 1, %s8
  %s11 = scalar_select 0, %s10, %s8
  $region1: #{tpu_custom_call.1} parent=0
    #allocation2 [shape = 'u8[2048]{0}', space=vmem, size = 0x800, scoped, tag = 'output window, operand 0, single buffered']
    #allocation3 [shape = 's32[1]{0}', space=sflag, size = 0x4, scoped, tag = 'scoped memory for tpu_custom_call.1']
    %12 = vsyncpa [#allocation3], 0
    // Predicated region
    $region2: #{tpu_custom_call.1} parent=1 // pred_check
      _
    $region3: #{tpu_custom_call.1} parent=1 // pred_check_branch
      %14 = sbr.rel (0) target = $region5
    $region4: #{tpu_custom_call.1} parent=1 // pred_region
      _
    $region5: #{tpu_custom_call.1} parent=1 // pred_fallthru
      _
    // Predicated region
    $region6: #{tpu_custom_call.1} parent=1 // pred_check
      _
    $region7: #{tpu_custom_call.1} parent=1 // pred_check_branch
      %16 = sbr.rel (0) target = $region9
    $region8: #{tpu_custom_call.1} parent=1 // pred_region
      _
    $region9: #{tpu_custom_call.1} parent=1 // pred_fallthru
      _
    // Predicated region
    $region10: #{tpu_custom_call.1} parent=1 // pred_check
      _
    $region11: #{tpu_custom_call.1} parent=1 // pred_check_branch
      %18 = sbr.rel (0) target = $region13
    $region12: #{tpu_custom_call.1} parent=1 // pred_region
      _
    $region13: #{tpu_custom_call.1} parent=1 // pred_fallthru
      _
    // Predicated region
    $region14: #{tpu_custom_call.1} parent=1 // pred_check
      _
    $region15: #{tpu_custom_call.1} parent=1 // pred_check_branch
      %20 = sbr.rel (0) target = $region17
    $region16: #{tpu_custom_call.1} parent=1 // pred_region
      _
    $region17: #{tpu_custom_call.1} parent=1 // pred_fallthru
      _
    // Predicated region
    $region18: #{tpu_custom_call.1} parent=1 // pred_check
      _
    $region19: #{tpu_custom_call.1} parent=1 // pred_check_branch
      %22 = sbr.rel (0) target = $region21
    $region20: #{tpu_custom_call.1} parent=1 // pred_region
      _
    $region21: #{tpu_custom_call.1} parent=1 // pred_fallthru
      _
    // Predicated region
    $region22: #{tpu_custom_call.1} parent=1 // pred_check
      _
    $region23: #{tpu_custom_call.1} parent=1 // pred_check_branch
      %24 = sbr.rel (0) target = $region25
    $region24: #{tpu_custom_call.1} parent=1 // pred_region
      _
    $region25: #{tpu_custom_call.1} parent=1 // pred_fallthru
      _
    // Predicated region
    $region26: #{tpu_custom_call.1} parent=1 // pred_check
      _
    $region27: #{tpu_custom_call.1} parent=1 // pred_check_branch
      %26 = sbr.rel (0) target = $region29
    $region28: #{tpu_custom_call.1} parent=1 // pred_region
      _
    $region29: #{tpu_custom_call.1} parent=1 // pred_fallthru
      _
    %v27 = vld [vmem:[%s1] sm:$0xff]
    %v28 = vld [vmem:[%s1 + $0x8] sm:$0xff]
    %v29 = vld [vmem:[%s1 + $0x10] sm:$0xff]
    %v30 = vld [vmem:[%s1 + $0x18] sm:$0xff]
    %v31 = vld [vmem:[%s2] sm:$0xff]
    %v32 = vld [vmem:[%s2 + $0x8] sm:$0xff]
    %v33 = vld [vmem:[%s2 + $0x10] sm:$0xff]
    %v34 = vld [vmem:[%s2 + $0x18] sm:$0xff]
    %v35 = vld [vmem:[%s3] sm:$0xff]
    %v36 = vld [vmem:[%s3 + $0x8] sm:$0xff]
    %v37 = vld [vmem:[%s3 + $0x10] sm:$0xff]
    %v38 = vld [vmem:[%s3 + $0x18] sm:$0xff]
    %v39 = vld [vmem:[%s5] sm:$0xf]
    %v40 = vld [vmem:[%s4] sm:$0xff]
    %v41 = vld [vmem:[%s4 + $0x8] sm:$0xff]
    %v42 = vld [vmem:[%s4 + $0x10] sm:$0xff]
    %v43 = vld [vmem:[%s4 + $0x18] sm:$0xff]
    %v44 = vld [vmem:[%s6] sm:$0xf]
    %v45 = vld [vmem:[%s0] sm:$0x3]
    %47 = vset.pattern.permute.xlu0 0
    %48 = vperm.xlu0 %47, %v27
    %v49 = vpop.permute.xlu0 %48
    %52 = vset.pattern.permute.xlu0 0
    %53 = vperm.xlu0 %52, %v28
    %v54 = vpop.permute.xlu0 %53
    %57 = vset.pattern.permute.xlu0 0
    %58 = vperm.xlu0 %57, %v29
    %v59 = vpop.permute.xlu0 %58
    %62 = vset.pattern.permute.xlu0 0
    %63 = vperm.xlu0 %62, %v30
    %v64 = vpop.permute.xlu0 %63
    %v66 = vperm.slane %v45, 0
    %v67 = vmul.f32 %v49, %v66
    %v68 = vmul.f32 %v54, %v66
    %v69 = vmul.f32 %v59, %v66
    %v70 = vmul.f32 %v64, %v66
    %72 = vset.pattern.permute.xlu0 0
    %73 = vperm.xlu0 %72, %v31
    %v74 = vpop.permute.xlu0 %73
    %77 = vset.pattern.permute.xlu0 0
    %78 = vperm.xlu0 %77, %v32
    %v79 = vpop.permute.xlu0 %78
    %82 = vset.pattern.permute.xlu0 0
    %83 = vperm.xlu0 %82, %v33
    %v84 = vpop.permute.xlu0 %83
    %87 = vset.pattern.permute.xlu0 0
    %88 = vperm.xlu0 %87, %v34
    %v89 = vpop.permute.xlu0 %88
    %v91 = vadd.f32 %v74, %v67
    %v92 = vadd.f32 %v79, %v68
    %v93 = vadd.f32 %v84, %v69
    %v94 = vadd.f32 %v89, %v70
    %95 = vset.pattern.permute.xlu0 1
    %96 = vperm.xlu0 %95, %v27
    %v97 = vpop.permute.xlu0 %96
    %99 = vset.pattern.permute.xlu0 1
    %100 = vperm.xlu0 %99, %v28
    %v101 = vpop.permute.xlu0 %100
    %103 = vset.pattern.permute.xlu0 1
    %104 = vperm.xlu0 %103, %v29
    %v105 = vpop.permute.xlu0 %104
    %107 = vset.pattern.permute.xlu0 1
    %108 = vperm.xlu0 %107, %v30
    %v109 = vpop.permute.xlu0 %108
    %v111 = vperm.slane %v45, 1
    %v112 = vmul.f32 %v97, %v111
    %v113 = vmul.f32 %v101, %v111
    %v114 = vmul.f32 %v105, %v111
    %v115 = vmul.f32 %v109, %v111
    %v116 = vadd.f32 %v91, %v112
    %v117 = vadd.f32 %v92, %v113
    %v118 = vadd.f32 %v93, %v114
    %v119 = vadd.f32 %v94, %v115
    %v120 = vmax.f32 %v116, 0.0
    %v121 = vmax.f32 %v117, 0.0
    %v122 = vmax.f32 %v118, 0.0
    %v123 = vmax.f32 %v119, 0.0
    %125 = vset.pattern.permute.xlu0 0
    %126 = vperm.xlu0 %125, %v40
    %v127 = vpop.permute.xlu0 %126
    %130 = vset.pattern.permute.xlu0 0
    %131 = vperm.xlu0 %130, %v41
    %v132 = vpop.permute.xlu0 %131
    %135 = vset.pattern.permute.xlu0 0
    %136 = vperm.xlu0 %135, %v42
    %v137 = vpop.permute.xlu0 %136
    %140 = vset.pattern.permute.xlu0 0
    %141 = vperm.xlu0 %140, %v43
    %v142 = vpop.permute.xlu0 %141
    %vm144 = vcmask 261120
    %v146 = vsel %vm144, %v35, 0
    %v149 = vsel %vm144, %v36, 0
    %v152 = vsel %vm144, %v37, 0
    %v155 = vsel %vm144, %v38, 0
    %157 = vmatpush.msra.mxu0 0.0
    %158 = vmatpush.msra.mxu0 0.0
    %159 = vmatpush.msra.mxu0 0.0
    %160 = vmatpush.msra.mxu0 0.0
    %161 = vmatpush.msra.mxu0 0.0
    %162 = vmatpush.msra.mxu0 0.0
    %163 = vmatpush.msra.mxu0 0.0
    %164 = vmatpush.msra.mxu0 0.0
    %165 = vmatpush.msra.mxu0 0.0
    %166 = vmatpush.msra.mxu0 0.0
    %167 = vmatpush.msra.mxu0 0.0
    %168 = vmatpush.msra.mxu0 0.0
    %169 = vmatpush.msra.mxu0 %v123
    %170 = vmatpush.msra.mxu0 %v122
    %171 = vmatpush.msra.mxu0 %v121
    %172 = vmatpush.msra.mxu0 %v120
    %173 = vmatmul.f32.gmra.mxu0 %v146
    %v174 = vpop.f32.mrf.mxu0
    %v175 = vadd.f32 %v127, %v174
    %176 = vmatmul.f32.gmra.mxu0 %v149
    %v177 = vpop.f32.mrf.mxu0
    %v178 = vadd.f32 %v132, %v177
    %179 = vmatmul.f32.gmra.mxu0 %v152
    %v180 = vpop.f32.mrf.mxu0
    %v181 = vadd.f32 %v137, %v180
    %182 = vmatmul.f32.gmra.mxu0 %v155
    %v183 = vpop.f32.mrf.mxu0
    %v184 = vadd.f32 %v142, %v183
    %185 = vdwg.mxu0
    %v186 = vmax.f32 %v175, 0.0
    %v187 = vmax.f32 %v178, 0.0
    %v188 = vmax.f32 %v181, 0.0
    %v189 = vmax.f32 %v184, 0.0
    %191 = vset.pattern.permute.xlu0 0
    %192 = vperm.xlu0 %191, %v44
    %v193 = vpop.permute.xlu0 %192
    %v196 = vsel %vm144, %v39, 0
    %198 = vmatpush.msra.mxu0 0.0
    %199 = vmatpush.msra.mxu0 0.0
    %200 = vmatpush.msra.mxu0 0.0
    %201 = vmatpush.msra.mxu0 0.0
    %202 = vmatpush.msra.mxu0 0.0
    %203 = vmatpush.msra.mxu0 0.0
    %204 = vmatpush.msra.mxu0 0.0
    %205 = vmatpush.msra.mxu0 0.0
    %206 = vmatpush.msra.mxu0 0.0
    %207 = vmatpush.msra.mxu0 0.0
    %208 = vmatpush.msra.mxu0 0.0
    %209 = vmatpush.msra.mxu0 0.0
    %210 = vmatpush.msra.mxu0 %v189
    %211 = vmatpush.msra.mxu0 %v188
    %212 = vmatpush.msra.mxu0 %v187
    %213 = vmatpush.msra.mxu0 %v186
    %214 = vmatmul.f32.gmra.mxu0 %v196
    %v215 = vpop.f32.mrf.mxu0
    %v216 = vadd.f32 %v193, %v215
    %217 = vdwg.mxu0
    %218 = vst [vmem:[#allocation2] sm:$0xf] %v216
    // Predicated region
    $region30: #{tpu_custom_call.1} parent=1 // pred_check
      _
    $region31: #{tpu_custom_call.1} parent=1 // pred_check_branch
      %220 = sbr.rel (0) target = $region33
    $region32: #{tpu_custom_call.1} parent=1 // pred_region
      %222 = vsyncadd [#allocation3], 0
      %s224 = sshll.u32 [#allocation2], 4
      %s225 = int_to_ptr.vmem [resolvable:$true] %s224
      %s226 = sshll.u32 %s7, 4
      %s227 = int_to_ptr.hbm [resolvable:$true] %s226
      %229 = dma.vmem_to_hbm [thread:$0]  %s225, 64, %s227, [#allocation3]
    $region33: #{tpu_custom_call.1} parent=1 // pred_fallthru
      _
    // Predicated region
    $region34: #{tpu_custom_call.1} parent=1 // pred_check
      _
    $region35: #{tpu_custom_call.1} parent=1 // pred_check_branch
      %231 = sbr.rel (0) target = $region37
    $region36: #{tpu_custom_call.1} parent=1 // pred_region
      %233 = dma.done [#allocation3], 64
    $region37: #{tpu_custom_call.1} parent=1 // pred_fallthru
      _
    %234 = vsyncpa [#allocation3], 1

</llo_original>
